<compile_context>
chip_gen: v5e
topology: v5e:2x2
jax: 0.10.0
libtpu: 0.0.40
codegen_flags: <defaults>
</compile_context>

<pallas_src>
import functools

import jax
import jax.numpy as jnp
from jax.experimental import pallas as pl
from jax.experimental.pallas import tpu as pltpu

P_EXPONENT = 3.0  # GeM(p=3, learnable=False) -> fixed scalar p
EPS = 1e-20

_NUM_INPUT_BUFFERS = 3                 # Buffered(3): keep HBM DMAs back-to-back
_PER_BUFFER_TARGET = 12 * 1024 * 1024  # ~12 MiB input tiles (review: 6-12 MiB)
_VMEM_BUDGET_CAP = 48 * 1024 * 1024    # safe vs v7x's 64 MiB per-TC VMEM
_MIN_GRID_STEPS = 8                    # >=8 steps so v7x's 2 TCs load-balance


def _vmem_budget_bytes():
    """Generation-aware VMEM budget; passed as an explicit vmem_limit_bytes."""
    try:
        capacity = int(pltpu.get_tpu_info().vmem_capacity_bytes)
    except Exception:  # conservative fallback if the query isn't available
        capacity = 64 * 1024 * 1024
    return max(8 * 1024 * 1024, min((capacity * 3) // 4, _VMEM_BUDGET_CAP))


def _pow_int(x, n):
    """x**n for integer n >= 1 via square-and-multiply (VPU only, no EUP)."""
    result = None
    base = x
    while n > 0:
        if n & 1:
            result = base if result is None else result * base
        n >>= 1
        if n:
            base = base * base
    return result


def _gem_kernel(x_ref, o_ref, *, p, inv_hw):
    # x_ref: (tile_r, H*W) block in VMEM; reduce over the last (lane) axis.
    x = x_ref[...].astype(jnp.float32)
    p_int = int(p)
    if float(p_int) == p and p_int >= 1:
        xp = _pow_int(x, p_int)       # integer p: pure VPU multiplies
    else:
        xp = jnp.power(x, p)          # fractional p fallback (EUP path)
    pooled = jnp.sum(xp, axis=-1, keepdims=True) * inv_hw + EPS  # spatial mean
    # pooled^(1/p) via exp(log(.)/p) on a (tile_r, 1) column (2 EUP ops).
    # NOTE: like torch.pow, a negative pooled mean yields NaN for fractional
    # roots; GeM is applied to post-ReLU feature maps so pooled >= 0.
    out = jnp.exp(jnp.log(pooled) * (1.0 / p))
    o_ref[...] = out.astype(o_ref.dtype)


def _choose_tile_rows(rows_padded, hw, itemsize, sublane, per_buffer_target):
    """Largest row tile that (a) divides rows_padded (no pad copy, no ragged
    tail block), (b) keeps the VMEM-padded block under per_buffer_target, and
    (c) leaves >= _MIN_GRID_STEPS grid steps when there is enough work."""
    lanes = -(-hw // 128) * 128               # lane axis pads to 128 in VMEM
    bytes_per_row = max(1, lanes * itemsize)
    max_rows = max(sublane, per_buffer_target // bytes_per_row)
    m = rows_padded // sublane
    max_d = max(1, min(m, max_rows // sublane))
    min_steps = _MIN_GRID_STEPS if m >= _MIN_GRID_STEPS else 1
    best = 1
    for d in range(1, max_d + 1):
        if m % d == 0 and (m // d) >= min_steps:
            best = d
    return best * sublane


def gem_pool(x, p=P_EXPONENT):
    """GeM pooling. x: (B, C, H, W) -> (B, C) (float32)."""
    b, c, h, w = x.shape
    rows = b * c
    hw = h * w
    x2d = x.reshape(rows, hw)
    itemsize = x2d.dtype.itemsize
    sublane = 16 if itemsize == 2 else 8      # bf16 packs 2 rows / sublane

    vmem_budget = _vmem_budget_bytes()
    per_buffer_target = min(_PER_BUFFER_TARGET,
                            vmem_budget // (_NUM_INPUT_BUFFERS + 1))

    lanes = -(-hw // 128) * 128
    whole_bytes = rows * lanes * itemsize
    if rows % sublane == 0:
        rows_padded = rows
        tile_r = _choose_tile_rows(rows_padded, hw, itemsize, sublane,
                                   per_buffer_target)
    elif whole_bytes <= per_buffer_target:
        # Odd row count but the whole array fits in one block: full-extent
        # block shapes are exempt from the 8-row rule -> no pad copy at all.
        rows_padded = rows
        tile_r = rows
    else:
        # Rare: pad only up to the next sublane multiple (a handful of rows),
        # never up to a multiple of the (possibly huge) tile.
        rows_padded = -(-rows // sublane) * sublane
        x2d = jnp.pad(x2d, ((0, rows_padded - rows), (0, 0)))
        tile_r = _choose_tile_rows(rows_padded, hw, itemsize, sublane,
                                   per_buffer_target)

    num_steps = rows_padded // tile_r

    # TODO(synk): if a single (sublane, hw) block ever exceeds the VMEM budget
    # (hw in the millions), add a second "arbitrary" grid axis over hw with a
    # pl.when-initialized (tile_r, 1) accumulator instead of one giant block.
    in_spec_args = ((tile_r, hw), lambda i: (i, 0))
    if num_steps >= _NUM_INPUT_BUFFERS:
        try:
            in_spec = pl.BlockSpec(
                *in_spec_args, pipeline_mode=pl.Buffered(_NUM_INPUT_BUFFERS))
        except TypeError:  # older jax without pipeline_mode on BlockSpec
            in_spec = pl.BlockSpec(*in_spec_args)
    else:
        in_spec = pl.BlockSpec(*in_spec_args)

    kernel = functools.partial(_gem_kernel, p=float(p), inv_hw=1.0 / float(hw))

    out = pl.pallas_call(
        kernel,
        out_shape=jax.ShapeDtypeStruct((rows_padded, 1), jnp.float32),
        grid_spec=pltpu.PrefetchScalarGridSpec(
            num_scalar_prefetch=0,
            grid=(num_steps,),
            in_specs=[in_spec],
            out_specs=pl.BlockSpec((tile_r, 1), lambda i: (i, 0)),
        ),
        compiler_params=pltpu.CompilerParams(
            # Rows are fully independent -> shard across v7x's 2 TensorCores.
            dimension_semantics=("parallel",),
            vmem_limit_bytes=vmem_budget,
        ),
    )(x2d)

    return out[:rows].reshape(b, c)
    # TODO(synk): for 7x7 / 14x14 feature maps a lane-dense NHWC -> (B*HW, C)
    # layout (C on lanes, reduce over a grid axis with an accumulator) would
    # avoid ~2.6x lane padding and give a lane-dense (B, C) output, but only
    # if NHWC is free upstream.


def gem_ref(x, p=P_EXPONENT):
    b, c, h, w = x.shape
    pooled = jnp.sum(jnp.power(x.astype(jnp.float32), p), axis=(2, 3)) / (h * w)
    return jnp.power(pooled + EPS, 1.0 / p)


if __name__ == "__main__":
    key = jax.random.PRNGKey(0)
    # GeM is typically applied to post-ReLU feature maps; use non-negative
    # inputs so the 1/p root of the pooled mean is well-defined (as in torch).
    x = jax.random.uniform(key, (2, 4, 16, 16), dtype=jnp.float32)

    y = gem_pool(x)
    jax.block_until_ready(y)

    y_ref = gem_ref(x)
    assert y.shape == (2, 4), y.shape
    assert jnp.allclose(y, y_ref, rtol=1e-5, atol=1e-6), (y, y_ref)

    print("KERNEL_OK")
</pallas_src>

<mosaic_0001>
module attributes {stable_mosaic.version = 11 : i64} {
  func.func @_gem_kernel(%arg0: i32, %arg1: memref<8x256xf32, #tpu.memory_space<vmem>>, %arg2: memref<8x1xf32, #tpu.memory_space<vmem>>) attributes {dimension_semantics = [#tpu.dimension_semantics<parallel>], iteration_bounds = array<i64: 1>, scalar_prefetch = 0 : i64, scratch_operands = 0 : i64, tpu.core_type = #tpu.core_type<tc>, window_params = [{transform_indices = @transform_0, window_bounds = array<i64: 8, 256>}, {transform_indices = @transform_1, window_bounds = array<i64: 8, 1>}]} {
    %c0 = arith.constant 0 : index
    %c0_0 = arith.constant 0 : index
    %0 = vector.load %arg1[%c0, %c0_0] : memref<8x256xf32, #tpu.memory_space<vmem>>, vector<8x256xf32>
    %1 = arith.mulf %0, %0 : vector<8x256xf32>
    %2 = arith.mulf %0, %1 : vector<8x256xf32>
    %cst = arith.constant dense<0.000000e+00> : vector<8xf32>
    %3 = vector.multi_reduction <add>, %2, %cst [1] : vector<8x256xf32> to vector<8xf32>
    %4 = vector.shape_cast %3 : vector<8xf32> to vector<8x1xf32>
    %cst_1 = arith.constant 3.906250e-03 : f32
    %5 = vector.broadcast %cst_1 : f32 to vector<8x1xf32>
    %6 = arith.mulf %4, %5 : vector<8x1xf32>
    %cst_2 = arith.constant 9.99999968E-21 : f32
    %7 = vector.broadcast %cst_2 : f32 to vector<8x1xf32>
    %8 = arith.addf %6, %7 : vector<8x1xf32>
    %9 = math.log %8 : vector<8x1xf32>
    %cst_3 = arith.constant 0.333333343 : f32
    %10 = vector.broadcast %cst_3 : f32 to vector<8x1xf32>
    %11 = arith.mulf %9, %10 : vector<8x1xf32>
    %12 = math.exp %11 : vector<8x1xf32>
    %c0_4 = arith.constant 0 : index
    %c0_5 = arith.constant 0 : index
    %13 = vector.load %arg2[%c0_4, %c0_5] : memref<8x1xf32, #tpu.memory_space<vmem>>, vector<8x1xf32>
    tpu.vector_store %arg2[%c0_4, %c0_5], %12 {strides = array<i32>} : memref<8x1xf32, #tpu.memory_space<vmem>>, vector<8x1xf32>,
    return
  }
  func.func @transform_0(%arg0: i32) -> (i32, i32) {
    %c0_i32 = arith.constant 0 : i32
    %c0_i32_0 = arith.constant 0 : i32
    return %arg0, %c0_i32 : i32, i32
  }
  func.func @transform_1(%arg0: i32) -> (i32, i32) {
    %c0_i32 = arith.constant 0 : i32
    %c0_i32_0 = arith.constant 0 : i32
    return %arg0, %c0_i32 : i32, i32
  }
}

</mosaic_0001>

<llo_original>
// kernel: tpu_custom_call.1
$region0: #{tpu_custom_call.1}
  #allocation0 [shape = 'u32[]', space=smem, size = 0x4, offset = 0x4, fixed_abs, tag = 'smem constant byte address 0x4 - core index']
  #allocation1 [shape = 'u32[72,128]{1,0:T(1,128)}', space=vmem, size = 0x9000, scoped, tag = 'internal scratch']
  %s0 = inlined_call_operand.hbm [shape: f32[8,256], index: 0, kind: input, shape index: {}]
  %s1 = inlined_call_operand.vmem [shape: f32[8,1], index: 1, kind: output, shape index: {}]
  %s2 = sld [smem:[#allocation0]]
  $region18: #{tpu_custom_call.1} parent=0
    _
  %s4 = ssub.s32 1, %s2
  %s5 = scalar_select 0, %s4, %s2
  $region1: #{tpu_custom_call.1} parent=0
    #allocation2 [shape = 'u8[8192]{0}', space=vmem, size = 0x2000, scoped, tag = 'input window, operand 0, single buffered']
    #allocation3 [shape = 's32[1]{0}', space=sflag, size = 0x4, scoped, tag = 'scoped memory for tpu_custom_call.1']
    %6 = vsyncpa [#allocation3], 0
    // Predicated region
    $region2: #{tpu_custom_call.1} parent=1 // pred_check
      _
    $region3: #{tpu_custom_call.1} parent=1 // pred_check_branch
      %8 = sbr.rel (0) target = $region5
    $region4: #{tpu_custom_call.1} parent=1 // pred_region
      %10 = vsyncadd [#allocation3], 0
      %s12 = sshll.u32 %s0, 4
      %s13 = int_to_ptr.hbm [resolvable:$true] %s12
      %s14 = sshll.u32 [#allocation2], 4
      %s15 = int_to_ptr.vmem [resolvable:$true] %s14
      %17 = dma.hbm_to_vmem [thread:$0]  %s13, 256, %s15, [#allocation3]
    $region5: #{tpu_custom_call.1} parent=1 // pred_fallthru
      _
    // Predicated region
    $region6: #{tpu_custom_call.1} parent=1 // pred_check
      _
    $region7: #{tpu_custom_call.1} parent=1 // pred_check_branch
      %19 = sbr.rel (0) target = $region9
    $region8: #{tpu_custom_call.1} parent=1 // pred_region
      %21 = dma.done [#allocation3], 256
    $region9: #{tpu_custom_call.1} parent=1 // pred_fallthru
      _
    %v22 = vld [vmem:[#allocation2] sm:$0xff]
    %v23 = vld [vmem:[#allocation2 + $0x8] sm:$0xff]
    %v24 = vmul.f32 %v22, %v22
    %v25 = vmul.f32 %v23, %v23
    %v26 = vmul.f32 %v22, %v24
    %v27 = vmul.f32 %v23, %v25
    %v28 = vadd.f32 %v26, %v27
    %29 = vadd.xlane.f32.xlu0 %v28
    %v30 = vpop.xlane.xlu0 %29
    %v31 = vmul.f32 %v30, 0.00390625
    %v32 = vadd.f32 %v31, 1e-20
    %v33 = vlog2.pop %v32
    %v34 = vmul.f32 %v33, 0.6931472
    %v35 = vmul.f32 %v34, 0.33333334
    %v36 = vmul.f32 %v35, 1.442695
    %v37 = vpow.pop %v36
    %vm38 = vcmask 7168
    %39 = vst.msk [vmem:[%s1] sm:$0xff] %vm38, %v37
    // Predicated region
    $region10: #{tpu_custom_call.1} parent=1 // pred_check
      _
    $region11: #{tpu_custom_call.1} parent=1 // pred_check_branch
      %41 = sbr.rel (0) target = $region13
    $region12: #{tpu_custom_call.1} parent=1 // pred_region
      _
    $region13: #{tpu_custom_call.1} parent=1 // pred_fallthru
      _
    // Predicated region
    $region14: #{tpu_custom_call.1} parent=1 // pred_check
      _
    $region15: #{tpu_custom_call.1} parent=1 // pred_check_branch
      %43 = sbr.rel (0) target = $region17
    $region16: #{tpu_custom_call.1} parent=1 // pred_region
      _
    $region17: #{tpu_custom_call.1} parent=1 // pred_fallthru
      _
    %44 = vsyncpa [#allocation3], 1

</llo_original>
